<compile_context>
chip_gen: v6e
topology: v6e:2x2x1
jax: 0.10.0
libtpu: 0.0.40
codegen_flags: <defaults>
</compile_context>

<pallas_src>
import jax
import jax.numpy as jnp
from jax import lax
from jax.experimental import pallas as pl
from jax.experimental.pallas import tpu as pltpu


def _efficient_attention_kernel(
    x_full_ref,    # (C, N)      full image (channels x flattened spatial)
    x_tile_ref,    # (C, TN)     current N-tile of the same image
    wk_ref,        # (Kc, C)
    bk_ref,        # (Kc, 1)
    wq_ref,        # (Kc, C)
    bq_ref,        # (Kc, 1)
    wv_ref,        # (Vc, C)
    bv_ref,        # (Vc, 1)
    wr_ref,        # (C, Vc)
    br_ref,        # (C, 1)
    ctx_mask_ref,  # (Kc, Vc)    1 where key-head == value-head, else 0
    seg_ref,       # (Kc, Kc)    1 where key channels share a head, else 0
    o_ref,         # (C, TN)
    ctx_ref,       # (Kc, Vc)    f32 scratch: masked global context, per batch
):
    n = pl.program_id(1)

    # ---- pass 1 (once per batch element): global-N key softmax + context ----
    @pl.when(n == 0)
    def _():
        xf = x_full_ref[...].astype(jnp.float32)                       # (C, N)
        k = jnp.dot(wk_ref[...], xf,
                    preferred_element_type=jnp.float32) + bk_ref[...]  # (Kc, N)
        v = jnp.dot(wv_ref[...], xf,
                    preferred_element_type=jnp.float32) + bv_ref[...]  # (Vc, N)

        # key softmax over the full spatial extent N (lane axis), per channel
        k_max = jnp.max(k, axis=1, keepdims=True)
        k_exp = jnp.exp(k - k_max)
        k_sm = k_exp * pl.reciprocal(
            jnp.sum(k_exp, axis=1, keepdims=True), approx=False)

        # context[kc, vc] = sum_n k_sm[kc, n] * v[vc, n]   -> (Kc, Vc)
        ctx = lax.dot_general(k_sm, v, (((1,), (1,)), ((), ())),
                              preferred_element_type=jnp.float32)
        # zero cross-head blocks so one full-width matmul == per-head matmuls
        ctx_ref[...] = ctx * ctx_mask_ref[...]

    # ---- pass 2 (every N-tile): query softmax, attend, reproject, residual --
    xt = x_tile_ref[...].astype(jnp.float32)                           # (C, TN)
    q = jnp.dot(wq_ref[...], xt,
                preferred_element_type=jnp.float32) + bq_ref[...]      # (Kc, TN)

    # per-head softmax over the head's key channels; subtracting the global
    # (over all Kc) per-position max is mathematically identical and avoids
    # any per-head slicing. The per-head denominator is one (Kc,Kc)x(Kc,TN)
    # matmul with the head-membership matrix.
    q_max = jnp.max(q, axis=0, keepdims=True)                          # (1, TN)
    q_exp = jnp.exp(q - q_max)
    seg_sum = jnp.dot(seg_ref[...], q_exp,
                      preferred_element_type=jnp.float32)              # (Kc, TN)
    q_sm = q_exp * pl.reciprocal(seg_sum, approx=False)

    # attended[vc, n] = sum_kc ctx[kc, vc] * q_sm[kc, n]   -> (Vc, TN)
    attended = lax.dot_general(ctx_ref[...], q_sm, (((0,), (0,)), ((), ())),
                               preferred_element_type=jnp.float32)

    reproj = jnp.dot(wr_ref[...], attended,
                     preferred_element_type=jnp.float32) + br_ref[...]  # (C, TN)

    o_ref[...] = (reproj + xt).astype(o_ref.dtype)


def efficient_attention(x_nchw, params, *, head_size: int, tile_n=None):
    """x_nchw: (B, C, H, W) float32. Returns (B, C, H, W)."""
    wk, bk, wq, bq, wv, bv, wr, br = params
    B, C, H, W = x_nchw.shape
    N = H * W
    Kc = wk.shape[0]
    Vc = wv.shape[0]
    key_cph = Kc // head_size
    val_cph = Vc // head_size

    # Native (B, C, N) layout: N (multiple of 128 for typical H*W) on lanes.
    x = x_nchw.reshape(B, C, N)

    # N tile for the query/output path (the K/V context uses the full N).
    if tile_n is None:
        tile_n = N
        for t in (512, 384, 256, 128):
            if N % t == 0:
                tile_n = t
                break
    assert N % tile_n == 0 and (tile_n % 128 == 0 or tile_n == N)
    nt = N // tile_n

    # Head structure encoded as two tiny constant matrices.
    head_k = jnp.arange(Kc, dtype=jnp.int32) // key_cph
    head_v = jnp.arange(Vc, dtype=jnp.int32) // val_cph
    ctx_mask = (head_k[:, None] == head_v[None, :]).astype(jnp.float32)  # (Kc, Vc)
    seg_mat = (head_k[:, None] == head_k[None, :]).astype(jnp.float32)   # (Kc, Kc)

    # Biases as (channels, 1) so they lane-broadcast over N.
    bk2 = bk.reshape(Kc, 1)
    bq2 = bq.reshape(Kc, 1)
    bv2 = bv.reshape(Vc, 1)
    br2 = br.reshape(C, 1)

    full = lambda a: pl.BlockSpec(a.shape, lambda b, n: (0,) * a.ndim)

    # Advisory cost estimate.
    flops = 2 * B * N * (C * (2 * Kc + Vc) + Kc * Vc + Kc * Kc + Kc * Vc + Vc * C)
    transcendentals = 2 * B * Kc * N
    bytes_accessed = 4 * (3 * B * C * N + 2 * Kc * C + 2 * Vc * C
                          + 2 * Kc + Vc + C + Kc * Vc + Kc * Kc)

    # Rough VMEM footprint (f32): resident full block + double-buffered tiles
    # + projection temporaries + weights; clamp into a safe range (<= 64 MiB
    # so the same config fits v7x's smaller per-TC VMEM).
    est_vmem = 4 * (2 * C * N + 4 * C * tile_n
                    + (Kc + Vc) * N + 2 * (Kc + Vc) * tile_n
                    + 2 * Kc * C + 2 * Vc * C + Kc * Vc + Kc * Kc + 1024)
    vmem_limit = int(min(max(2 * est_vmem, 16 << 20), 64 << 20))

    out = pl.pallas_call(
        _efficient_attention_kernel,
        out_shape=jax.ShapeDtypeStruct((B, C, N), x.dtype),
        grid=(B, nt),
        in_specs=[
            # full image, resident across the inner N-tile axis (K/V pass)
            pl.BlockSpec((None, C, N), lambda b, n: (b, 0, 0)),
            # current N-tile (query / residual / output pass)
            pl.BlockSpec((None, C, tile_n), lambda b, n: (b, 0, n)),
            full(wk), full(bk2), full(wq), full(bq2),
            full(wv), full(bv2), full(wr), full(br2),
            full(ctx_mask), full(seg_mat),
        ],
        out_specs=pl.BlockSpec((None, C, tile_n), lambda b, n: (b, 0, n)),
        scratch_shapes=[pltpu.VMEM((Kc, Vc), jnp.float32)],
        compiler_params=pltpu.CompilerParams(
            dimension_semantics=("parallel", "arbitrary"),
            vmem_limit_bytes=vmem_limit),
        cost_estimate=pl.CostEstimate(
            flops=flops,
            transcendentals=transcendentals,
            bytes_accessed=bytes_accessed),
    )(x, x, wk, bk2, wq, bq2, wv, bv2, wr, br2, ctx_mask, seg_mat)

    return out.reshape(B, C, H, W)


def _reference(x_nchw, params, *, head_size: int):
    """Plain-JAX reference mirroring the PyTorch forward exactly (NCHW)."""
    wk, bk, wq, bq, wv, bv, wr, br = params
    B, C, H, W = x_nchw.shape
    N = H * W
    Kc, Vc = wk.shape[0], wv.shape[0]
    kcp, vcp = Kc // head_size, Vc // head_size

    xf = x_nchw.reshape(B, C, N)                                   # (B, C, N)
    keys = jnp.einsum('oc,bcn->bon', wk, xf) + bk.reshape(1, Kc, 1)
    qrys = jnp.einsum('oc,bcn->bon', wq, xf) + bq.reshape(1, Kc, 1)
    vals = jnp.einsum('oc,bcn->bon', wv, xf) + bv.reshape(1, Vc, 1)

    heads = []
    for i in range(head_size):
        key = jax.nn.softmax(keys[:, i * kcp:(i + 1) * kcp], axis=2)   # (B, dk, N)
        qry = jax.nn.softmax(qrys[:, i * kcp:(i + 1) * kcp], axis=1)   # (B, dk, N)
        val = vals[:, i * vcp:(i + 1) * vcp]                           # (B, dv, N)
        ctx = jnp.einsum('bkn,bvn->bkv', key, val)                     # (B, dk, dv)
        att = jnp.einsum('bkv,bkn->bvn', ctx, qry)                     # (B, dv, N)
        heads.append(att)
    agg = jnp.concatenate(heads, axis=1)                               # (B, Vc, N)
    rep = jnp.einsum('ov,bvn->bon', wr, agg) + br.reshape(1, C, 1)
    return (rep + xf).reshape(B, C, H, W)


if __name__ == "__main__":
    B, C, H, W = 2, 4, 16, 16
    key_channels, value_channels, head_size = 8, 8, 2

    root = jax.random.PRNGKey(0)
    ks = jax.random.split(root, 9)
    scale = 0.1
    wk = scale * jax.random.normal(ks[0], (key_channels, C), jnp.float32)
    bk = scale * jax.random.normal(ks[1], (key_channels,), jnp.float32)
    wq = scale * jax.random.normal(ks[2], (key_channels, C), jnp.float32)
    bq = scale * jax.random.normal(ks[3], (key_channels,), jnp.float32)
    wv = scale * jax.random.normal(ks[4], (value_channels, C), jnp.float32)
    bv = scale * jax.random.normal(ks[5], (value_channels,), jnp.float32)
    wr = scale * jax.random.normal(ks[6], (C, value_channels), jnp.float32)
    br = scale * jax.random.normal(ks[7], (C,), jnp.float32)
    params = (wk, bk, wq, bq, wv, bv, wr, br)

    x = jax.random.normal(ks[8], (B, C, H, W), jnp.float32)

    # tile_n=128 exercises the tiled (two-pass) path: N = 256 -> 2 tiles.
    out = efficient_attention(x, params, head_size=head_size, tile_n=128)
    out = jax.block_until_ready(out)

    ref = jax.block_until_ready(_reference(x, params, head_size=head_size))
    assert out.shape == (B, C, H, W)
    assert jnp.allclose(out, ref, atol=1e-5, rtol=1e-5), (
        float(jnp.max(jnp.abs(out - ref))))

    print("KERNEL_OK")
</pallas_src>

<mosaic_0001>
module attributes {stable_mosaic.version = 11 : i64} {
  func.func @_efficient_attention_kernel(%arg0: i32, %arg1: i32, %arg2: memref<1x4x256xf32, #tpu.memory_space<vmem>>, %arg3: memref<1x4x128xf32, #tpu.memory_space<vmem>>, %arg4: memref<8x4xf32, #tpu.memory_space<vmem>>, %arg5: memref<8x1xf32, #tpu.memory_space<vmem>>, %arg6: memref<8x4xf32, #tpu.memory_space<vmem>>, %arg7: memref<8x1xf32, #tpu.memory_space<vmem>>, %arg8: memref<8x4xf32, #tpu.memory_space<vmem>>, %arg9: memref<8x1xf32, #tpu.memory_space<vmem>>, %arg10: memref<4x8xf32, #tpu.memory_space<vmem>>, %arg11: memref<4x1xf32, #tpu.memory_space<vmem>>, %arg12: memref<8x8xf32, #tpu.memory_space<vmem>>, %arg13: memref<8x8xf32, #tpu.memory_space<vmem>>, %arg14: memref<1x4x128xf32, #tpu.memory_space<vmem>>, %arg15: memref<8x8xf32, #tpu.memory_space<vmem>>) attributes {dimension_semantics = [#tpu.dimension_semantics<parallel>, #tpu.dimension_semantics<arbitrary>], iteration_bounds = array<i64: 2, 2>, scalar_prefetch = 0 : i64, scratch_operands = 1 : i64, tpu.core_type = #tpu.core_type<tc>, window_params = [{transform_indices = @transform_0, window_bounds = array<i64: 1, 4, 256>}, {transform_indices = @transform_1, window_bounds = array<i64: 1, 4, 128>}, {pipeline_mode = #tpu.pipeline_mode<synchronous>, transform_indices = @transform_2, window_bounds = array<i64: 8, 4>}, {pipeline_mode = #tpu.pipeline_mode<synchronous>, transform_indices = @transform_3, window_bounds = array<i64: 8, 1>}, {pipeline_mode = #tpu.pipeline_mode<synchronous>, transform_indices = @transform_4, window_bounds = array<i64: 8, 4>}, {pipeline_mode = #tpu.pipeline_mode<synchronous>, transform_indices = @transform_5, window_bounds = array<i64: 8, 1>}, {pipeline_mode = #tpu.pipeline_mode<synchronous>, transform_indices = @transform_6, window_bounds = array<i64: 8, 4>}, {pipeline_mode = #tpu.pipeline_mode<synchronous>, transform_indices = @transform_7, window_bounds = array<i64: 8, 1>}, {pipeline_mode = #tpu.pipeline_mode<synchronous>, transform_indices = @transform_8, window_bounds = array<i64: 4, 8>}, {pipeline_mode = #tpu.pipeline_mode<synchronous>, transform_indices = @transform_9, window_bounds = array<i64: 4, 1>}, {pipeline_mode = #tpu.pipeline_mode<synchronous>, transform_indices = @transform_10, window_bounds = array<i64: 8, 8>}, {pipeline_mode = #tpu.pipeline_mode<synchronous>, transform_indices = @transform_11, window_bounds = array<i64: 8, 8>}, {transform_indices = @transform_12, window_bounds = array<i64: 1, 4, 128>}]} {
    %c0_i32 = arith.constant 0 : i32
    %0 = arith.cmpi eq, %arg1, %c0_i32 : i32
    %1 = arith.extui %0 : i1 to i32
    %c0_i32_0 = arith.constant 0 : i32
    %2 = arith.cmpi ne, %1, %c0_i32_0 : i32
    scf.if %2 {
      %c0_22 = arith.constant 0 : index
      %c0_23 = arith.constant 0 : index
      %c0_24 = arith.constant 0 : index
      %30 = vector.load %arg2[%c0_22, %c0_23, %c0_24] : memref<1x4x256xf32, #tpu.memory_space<vmem>>, vector<1x4x256xf32>
      %31 = vector.shape_cast %30 : vector<1x4x256xf32> to vector<4x256xf32>
      %c0_25 = arith.constant 0 : index
      %c0_26 = arith.constant 0 : index
      %32 = vector.load %arg4[%c0_25, %c0_26] : memref<8x4xf32, #tpu.memory_space<vmem>>, vector<8x4xf32>
      %cst_27 = arith.constant dense<0.000000e+00> : vector<8x256xf32>
      %33 = tpu.matmul %32, %31, %cst_27 {dimension_numbers = #tpu.dot_dimension_numbers<[1], [0], [0], [1], [0, 0, 1, 1], [], []>} : vector<8x4xf32>, vector<4x256xf32>, vector<8x256xf32> -> vector<8x256xf32>
      %c0_28 = arith.constant 0 : index
      %c0_29 = arith.constant 0 : index
      %34 = vector.load %arg5[%c0_28, %c0_29] : memref<8x1xf32, #tpu.memory_space<vmem>>, vector<8x1xf32>
      %35 = vector.broadcast %34 : vector<8x1xf32> to vector<8x256xf32>
      %36 = arith.addf %33, %35 : vector<8x256xf32>
      %c0_30 = arith.constant 0 : index
      %c0_31 = arith.constant 0 : index
      %37 = vector.load %arg8[%c0_30, %c0_31] : memref<8x4xf32, #tpu.memory_space<vmem>>, vector<8x4xf32>
      %cst_32 = arith.constant dense<0.000000e+00> : vector<8x256xf32>
      %38 = tpu.matmul %37, %31, %cst_32 {dimension_numbers = #tpu.dot_dimension_numbers<[1], [0], [0], [1], [0, 0, 1, 1], [], []>} : vector<8x4xf32>, vector<4x256xf32>, vector<8x256xf32> -> vector<8x256xf32>
      %c0_33 = arith.constant 0 : index
      %c0_34 = arith.constant 0 : index
      %39 = vector.load %arg9[%c0_33, %c0_34] : memref<8x1xf32, #tpu.memory_space<vmem>>, vector<8x1xf32>
      %40 = vector.broadcast %39 : vector<8x1xf32> to vector<8x256xf32>
      %41 = arith.addf %38, %40 : vector<8x256xf32>
      %cst_35 = arith.constant dense<0xFF800000> : vector<8xf32>
      %42 = vector.multi_reduction <maximumf>, %36, %cst_35 [1] : vector<8x256xf32> to vector<8xf32>
      %43 = vector.shape_cast %42 : vector<8xf32> to vector<8x1xf32>
      %44 = vector.broadcast %43 : vector<8x1xf32> to vector<8x256xf32>
      %45 = arith.subf %36, %44 : vector<8x256xf32>
      %46 = math.exp %45 : vector<8x256xf32>
      %cst_36 = arith.constant dense<0.000000e+00> : vector<8xf32>
      %47 = vector.multi_reduction <add>, %46, %cst_36 [1] : vector<8x256xf32> to vector<8xf32>
      %48 = vector.shape_cast %47 : vector<8xf32> to vector<8x1xf32>
      %49 = tpu.reciprocal %48 : vector<8x1xf32> -> vector<8x1xf32>
      %50 = vector.broadcast %49 : vector<8x1xf32> to vector<8x256xf32>
      %51 = arith.mulf %46, %50 : vector<8x256xf32>
      %cst_37 = arith.constant dense<0.000000e+00> : vector<8x8xf32>
      %52 = tpu.matmul %51, %41, %cst_37 {dimension_numbers = #tpu.dot_dimension_numbers<[1], [1], [0], [0], [0, 0, 1, 0], [], []>} : vector<8x256xf32>, vector<8x256xf32>, vector<8x8xf32> -> vector<8x8xf32>
      %c0_38 = arith.constant 0 : index
      %c0_39 = arith.constant 0 : index
      %53 = vector.load %arg12[%c0_38, %c0_39] : memref<8x8xf32, #tpu.memory_space<vmem>>, vector<8x8xf32>
      %54 = arith.mulf %52, %53 : vector<8x8xf32>
      %c0_40 = arith.constant 0 : index
      %c0_41 = arith.constant 0 : index
      %55 = vector.load %arg15[%c0_40, %c0_41] : memref<8x8xf32, #tpu.memory_space<vmem>>, vector<8x8xf32>
      tpu.vector_store %arg15[%c0_40, %c0_41], %54 {strides = array<i32>} : memref<8x8xf32, #tpu.memory_space<vmem>>, vector<8x8xf32>,
    } else {
    }
    %c0 = arith.constant 0 : index
    %c0_1 = arith.constant 0 : index
    %c0_2 = arith.constant 0 : index
    %3 = vector.load %arg3[%c0, %c0_1, %c0_2] : memref<1x4x128xf32, #tpu.memory_space<vmem>>, vector<1x4x128xf32>
    %4 = vector.shape_cast %3 : vector<1x4x128xf32> to vector<4x128xf32>
    %c0_3 = arith.constant 0 : index
    %c0_4 = arith.constant 0 : index
    %5 = vector.load %arg6[%c0_3, %c0_4] : memref<8x4xf32, #tpu.memory_space<vmem>>, vector<8x4xf32>
    %cst = arith.constant dense<0.000000e+00> : vector<8x128xf32>
    %6 = tpu.matmul %5, %4, %cst {dimension_numbers = #tpu.dot_dimension_numbers<[1], [0], [0], [1], [0, 0, 1, 1], [], []>} : vector<8x4xf32>, vector<4x128xf32>, vector<8x128xf32> -> vector<8x128xf32>
    %c0_5 = arith.constant 0 : index
    %c0_6 = arith.constant 0 : index
    %7 = vector.load %arg7[%c0_5, %c0_6] : memref<8x1xf32, #tpu.memory_space<vmem>>, vector<8x1xf32>
    %8 = vector.broadcast %7 : vector<8x1xf32> to vector<8x128xf32>
    %9 = arith.addf %6, %8 : vector<8x128xf32>
    %cst_7 = arith.constant dense<0xFF800000> : vector<128xf32>
    %10 = vector.multi_reduction <maximumf>, %9, %cst_7 [0] : vector<8x128xf32> to vector<128xf32>
    %11 = vector.shape_cast %10 : vector<128xf32> to vector<1x128xf32>
    %12 = vector.broadcast %11 : vector<1x128xf32> to vector<8x128xf32>
    %13 = arith.subf %9, %12 : vector<8x128xf32>
    %14 = math.exp %13 : vector<8x128xf32>
    %c0_8 = arith.constant 0 : index
    %c0_9 = arith.constant 0 : index
    %15 = vector.load %arg13[%c0_8, %c0_9] : memref<8x8xf32, #tpu.memory_space<vmem>>, vector<8x8xf32>
    %cst_10 = arith.constant dense<0.000000e+00> : vector<8x128xf32>
    %16 = tpu.matmul %15, %14, %cst_10 {dimension_numbers = #tpu.dot_dimension_numbers<[1], [0], [0], [1], [0, 0, 1, 1], [], []>} : vector<8x8xf32>, vector<8x128xf32>, vector<8x128xf32> -> vector<8x128xf32>
    %17 = tpu.reciprocal %16 : vector<8x128xf32> -> vector<8x128xf32>
    %18 = arith.mulf %14, %17 : vector<8x128xf32>
    %c0_11 = arith.constant 0 : index
    %c0_12 = arith.constant 0 : index
    %19 = vector.load %arg15[%c0_11, %c0_12] : memref<8x8xf32, #tpu.memory_space<vmem>>, vector<8x8xf32>
    %cst_13 = arith.constant dense<0.000000e+00> : vector<8x128xf32>
    %20 = tpu.matmul %19, %18, %cst_13 {dimension_numbers = #tpu.dot_dimension_numbers<[0], [0], [1], [1], [0, 1, 1, 1], [], []>} : vector<8x8xf32>, vector<8x128xf32>, vector<8x128xf32> -> vector<8x128xf32>
    %c0_14 = arith.constant 0 : index
    %c0_15 = arith.constant 0 : index
    %21 = vector.load %arg10[%c0_14, %c0_15] : memref<4x8xf32, #tpu.memory_space<vmem>>, vector<4x8xf32>
    %cst_16 = arith.constant dense<0.000000e+00> : vector<4x128xf32>
    %22 = tpu.matmul %21, %20, %cst_16 {dimension_numbers = #tpu.dot_dimension_numbers<[1], [0], [0], [1], [0, 0, 1, 1], [], []>} : vector<4x8xf32>, vector<8x128xf32>, vector<4x128xf32> -> vector<4x128xf32>
    %c0_17 = arith.constant 0 : index
    %c0_18 = arith.constant 0 : index
    %23 = vector.load %arg11[%c0_17, %c0_18] : memref<4x1xf32, #tpu.memory_space<vmem>>, vector<4x1xf32>
    %24 = vector.broadcast %23 : vector<4x1xf32> to vector<4x128xf32>
    %25 = arith.addf %22, %24 : vector<4x128xf32>
    %26 = arith.addf %25, %4 : vector<4x128xf32>
    %c0_19 = arith.constant 0 : index
    %c0_20 = arith.constant 0 : index
    %c0_21 = arith.constant 0 : index
    %27 = vector.load %arg14[%c0_19, %c0_20, %c0_21] : memref<1x4x128xf32, #tpu.memory_space<vmem>>, vector<1x4x128xf32>
    %28 = vector.shape_cast %27 : vector<1x4x128xf32> to vector<4x128xf32>
    %29 = vector.shape_cast %26 : vector<4x128xf32> to vector<1x4x128xf32>
    tpu.vector_store %arg14[%c0_19, %c0_20, %c0_21], %29 {strides = array<i32>} : memref<1x4x128xf32, #tpu.memory_space<vmem>>, vector<1x4x128xf32>,
    return
  }
  func.func @transform_0(%arg0: i32, %arg1: i32) -> (i32, i32, i32) {
    %c0_i32 = arith.constant 0 : i32
    %c0_i32_0 = arith.constant 0 : i32
    %c0_i32_1 = arith.constant 0 : i32
    return %arg0, %c0_i32, %c0_i32_0 : i32, i32, i32
  }
  func.func @transform_1(%arg0: i32, %arg1: i32) -> (i32, i32, i32) {
    %c0_i32 = arith.constant 0 : i32
    %c0_i32_0 = arith.constant 0 : i32
    return %arg0, %c0_i32, %arg1 : i32, i32, i32
  }
  func.func @transform_2(%arg0: i32, %arg1: i32) -> (i32, i32) {
    %c0_i32 = arith.constant 0 : i32
    %c0_i32_0 = arith.constant 0 : i32
    %c0_i32_1 = arith.constant 0 : i32
    return %c0_i32, %c0_i32_0 : i32, i32
  }
  func.func @transform_3(%arg0: i32, %arg1: i32) -> (i32, i32) {
    %c0_i32 = arith.constant 0 : i32
    %c0_i32_0 = arith.constant 0 : i32
    %c0_i32_1 = arith.constant 0 : i32
    return %c0_i32, %c0_i32_0 : i32, i32
  }
  func.func @transform_4(%arg0: i32, %arg1: i32) -> (i32, i32) {
    %c0_i32 = arith.constant 0 : i32
    %c0_i32_0 = arith.constant 0 : i32
    %c0_i32_1 = arith.constant 0 : i32
    return %c0_i32, %c0_i32_0 : i32, i32
  }
  func.func @transform_5(%arg0: i32, %arg1: i32) -> (i32, i32) {
    %c0_i32 = arith.constant 0 : i32
    %c0_i32_0 = arith.constant 0 : i32
    %c0_i32_1 = arith.constant 0 : i32
    return %c0_i32, %c0_i32_0 : i32, i32
  }
  func.func @transform_6(%arg0: i32, %arg1: i32) -> (i32, i32) {
    %c0_i32 = arith.constant 0 : i32
    %c0_i32_0 = arith.constant 0 : i32
    %c0_i32_1 = arith.constant 0 : i32
    return %c0_i32, %c0_i32_0 : i32, i32
  }
  func.func @transform_7(%arg0: i32, %arg1: i32) -> (i32, i32) {
    %c0_i32 = arith.constant 0 : i32
    %c0_i32_0 = arith.constant 0 : i32
    %c0_i32_1 = arith.constant 0 : i32
    return %c0_i32, %c0_i32_0 : i32, i32
  }
  func.func @transform_8(%arg0: i32, %arg1: i32) -> (i32, i32) {
    %c0_i32 = arith.constant 0 : i32
    %c0_i32_0 = arith.constant 0 : i32
    %c0_i32_1 = arith.constant 0 : i32
    return %c0_i32, %c0_i32_0 : i32, i32
  }
  func.func @transform_9(%arg0: i32, %arg1: i32) -> (i32, i32) {
    %c0_i32 = arith.constant 0 : i32
    %c0_i32_0 = arith.constant 0 : i32
    %c0_i32_1 = arith.constant 0 : i32
    return %c0_i32, %c0_i32_0 : i32, i32
  }
  func.func @transform_10(%arg0: i32, %arg1: i32) -> (i32, i32) {
    %c0_i32 = arith.constant 0 : i32
    %c0_i32_0 = arith.constant 0 : i32
    %c0_i32_1 = arith.constant 0 : i32
    return %c0_i32, %c0_i32_0 : i32, i32
  }
  func.func @transform_11(%arg0: i32, %arg1: i32) -> (i32, i32) {
    %c0_i32 = arith.constant 0 : i32
    %c0_i32_0 = arith.constant 0 : i32
    %c0_i32_1 = arith.constant 0 : i32
    return %c0_i32, %c0_i32_0 : i32, i32
  }
  func.func @transform_12(%arg0: i32, %arg1: i32) -> (i32, i32, i32) {
    %c0_i32 = arith.constant 0 : i32
    %c0_i32_0 = arith.constant 0 : i32
    return %arg0, %c0_i32, %arg1 : i32, i32, i32
  }
}

</mosaic_0001>

<llo_original>
// kernel: tpu_custom_call.1
$region0: #{tpu_custom_call.1}
  #allocation0 [shape = 'u32[]', space=smem, size = 0x4, offset = 0x4, fixed_abs, tag = 'smem constant byte address 0x4 - core index']
  #allocation1 [shape = 'u32[144,128]{1,0:T(1,128)}', space=vmem, size = 0x12000, scoped, tag = 'internal scratch']
  #allocation2 [shape = 'f32[8,8]{1,0:T(8,128)}', space=vmem, size = 0x1000, scoped, tag = 'scratch operand']
  %s0 = inlined_call_operand.vmem [shape: f32[2,4,256], index: 0, kind: input, shape index: {}]
  %s1 = inlined_call_operand.vmem [shape: f32[2,4,256], index: 1, kind: input, shape index: {}]
  %s2 = inlined_call_operand.vmem [shape: f32[8,4], index: 2, kind: input, shape index: {}]
  %s3 = inlined_call_operand.vmem [shape: f32[8,1], index: 3, kind: input, shape index: {}]
  %s4 = inlined_call_operand.vmem [shape: f32[8,4], index: 4, kind: input, shape index: {}]
  %s5 = inlined_call_operand.vmem [shape: f32[8,1], index: 5, kind: input, shape index: {}]
  %s6 = inlined_call_operand.vmem [shape: f32[8,4], index: 6, kind: input, shape index: {}]
  %s7 = inlined_call_operand.vmem [shape: f32[8,1], index: 7, kind: input, shape index: {}]
  %s8 = inlined_call_operand.vmem [shape: f32[4,8], index: 8, kind: input, shape index: {}]
  %s9 = inlined_call_operand.vmem [shape: f32[4,1], index: 9, kind: input, shape index: {}]
  %s10 = inlined_call_operand.vmem [shape: f32[8,8], index: 10, kind: input, shape index: {}]
  %s11 = inlined_call_operand.vmem [shape: f32[8,8], index: 11, kind: input, shape index: {}]
  %s12 = inlined_call_operand.hbm [shape: f32[2,4,256], index: 12, kind: output, shape index: {}]
  %s13 = sld [smem:[#allocation0]]
  $region85: #{tpu_custom_call.1} parent=0
    _
  %s15 = ssub.s32 1, %s13
  %s16 = scalar_select 0, %s15, %s13
  $region1: #{tpu_custom_call.1} parent=0
    #allocation3 [shape = 'u8[4096]{0}', space=vmem, size = 0x1000, scoped, tag = 'output window, operand 0']
    #allocation4 [shape = 's32[2]{0}', space=sflag, size = 0x8, scoped, tag = 'scoped memory for tpu_custom_call.1']
    %17 = vsyncpa [#allocation4], 0
    %s18 = scalar_lea.sflag [#allocation4], 1
    %19 = vsyncpa %s18, 0
    loop: start=0, step=1, limit=6
    $region2: #{tpu_custom_call.1} parent=1 // loop_pre_header
      _
    $region3: #{tpu_custom_call.1} parent=1 // loop_header
      %s21 = sphi 0, %s25
      %p22 = scmp.ge.s32.totalorder %s21, 6
      %s28 = sphi 0, %s40
      %s29 = sphi 0, %s36
      %s30 = sphi 0, %s28
      %s31 = sphi 0, %s29
      %s32 = sphi 0, %s30
      %s33 = sphi 0, %s31
      %s43 = sphi 0, %s45
      %s46 = sphi 0, %s43
      %s47 = sphi 0, %s46
      %s63 = sphi 0, %s47
      %s71 = sphi 0, %s73
      %s74 = sphi 0, %s71
      %s75 = sphi 0, %s74
      %s91 = sphi 0, %s75
      %s95 = sphi 0, %s95
      %s97 = sphi 0, %s95
      %s98 = sphi 0, %s97
      %s112 = sphi 0, %s98
      %s116 = sphi 0, %s116
      %s118 = sphi 0, %s116
      %s119 = sphi 0, %s118
      %s133 = sphi 0, %s119
      %s137 = sphi 0, %s137
      %s139 = sphi 0, %s137
      %s140 = sphi 0, %s139
      %s154 = sphi 0, %s140
      %s158 = sphi 0, %s158
      %s160 = sphi 0, %s158
      %s161 = sphi 0, %s160
      %s175 = sphi 0, %s161
      %s179 = sphi 0, %s179
      %s181 = sphi 0, %s179
      %s182 = sphi 0, %s181
      %s196 = sphi 0, %s182
      %s200 = sphi 0, %s200
      %s202 = sphi 0, %s200
      %s203 = sphi 0, %s202
      %s217 = sphi 0, %s203
      %s221 = sphi 0, %s221
      %s223 = sphi 0, %s221
      %s224 = sphi 0, %s223
      %s238 = sphi 0, %s224
      %s242 = sphi 0, %s242
      %s244 = sphi 0, %s242
      %s245 = sphi 0, %s244
      %s259 = sphi 0, %s245
      %s263 = sphi 0, %s263
      %s265 = sphi 0, %s263
      %s266 = sphi 0, %s265
      %s280 = sphi 0, %s266
      %s284 = sphi 0, %s284
      %s286 = sphi 0, %s284
      %s287 = sphi 0, %s286
      %s301 = sphi 0, %s287
      %s309 = sphi 0, %s311
      %s312 = sphi 0, %s309
      %s313 = sphi 0, %s312
      %s329 = sphi 0, %s313
    $region4: #{tpu_custom_call.1} parent=1 // loop_header_branch
      %24 = sbr.rel (%p22) target = $region8
    $region5: #{tpu_custom_call.1} parent=1 // loop_body
      %s26 = ssub.s32 %s21, 1
      %s27 = ssub.s32 %s21, 2
      %s34 = sadd.s32 1, %s29
      %p35 = scmp.ge.s32.totalorder %s34, 2
      %s36 = scalar_select %p35, 0, %s34
      %s37 = sadd.s32 1, %s28
      %s38 = scalar_select %p35, %s37, %s28
      %p39 = scmp.ge.s32.totalorder %s38, 2
      %s40 = scalar_select %p39, 0, %s38
      %s41 = ssub.s32 %s28, %s40
      %p42 = scmp.eq.s32.totalorder %s41, 0
      %s44 = sadd.s32 %s43, 1
      %s45 = scalar_select %p42, %s43, %s44
      %p48 = pneg %p42
      %p49 = scmp.eq.s32.totalorder %s21, 3
      %p50 = por %p48, %p49
      %p51 = scmp.ne.s32.totalorder %s43, %s46
      %p52 = scmp.eq.s32.totalorder %s21, 0
      %p53 = por %p51, %p52
      %p54 = scmp.ne.s32.totalorder %s43, %s46
      %p55 = scmp.eq.s32.totalorder %s26, 3
      %p56 = por %p54, %p55
      %p57 = scmp.ne.s32.totalorder %s46, %s47
      %p58 = scmp.eq.s32.totalorder %s26, 0
      %p59 = por %p57, %p58
      %p60 = scmp.ne.s32.totalorder %s46, %s47
      %p61 = scmp.eq.s32.totalorder %s27, 3
      %p62 = por %p60, %p61
      %p64 = scmp.ne.s32.totalorder %s47, %s63
      %p65 = scmp.eq.s32.totalorder %s27, 0
      %p66 = por %p64, %p65
      %s67 = ssub.s32 %s28, %s40
      %s68 = ssub.s32 %s29, %s36
      %s69 = sor.u32 %s67, %s68
      %p70 = scmp.eq.s32.totalorder %s69, 0
      %s72 = sadd.s32 %s71, 1
      %s73 = scalar_select %p70, %s71, %s72
      %p76 = pneg %p70
      %p77 = scmp.eq.s32.totalorder %s21, 3
      %p78 = por %p76, %p77
      %p79 = scmp.ne.s32.totalorder %s71, %s74
      %p80 = scmp.eq.s32.totalorder %s21, 0
      %p81 = por %p79, %p80
      %p82 = scmp.ne.s32.totalorder %s71, %s74
      %p83 = scmp.eq.s32.totalorder %s26, 3
      %p84 = por %p82, %p83
      %p85 = scmp.ne.s32.totalorder %s74, %s75
      %p86 = scmp.eq.s32.totalorder %s26, 0
      %p87 = por %p85, %p86
      %p88 = scmp.ne.s32.totalorder %s74, %s75
      %p89 = scmp.eq.s32.totalorder %s27, 3
      %p90 = por %p88, %p89
      %p92 = scmp.ne.s32.totalorder %s75, %s91
      %p93 = scmp.eq.s32.totalorder %s27, 0
      %p94 = por %p92, %p93
      %s96 = sadd.s32 %s95, 1
      %p99 = scmp.eq.s32.totalorder %s21, 3
      %p100 = scmp.ne.s32.totalorder %s95, %s97
      %p101 = scmp.eq.s32.totalorder %s21, 0
      %p102 = por %p100, %p101
      %p103 = scmp.ne.s32.totalorder %s95, %s97
      %p104 = scmp.eq.s32.totalorder %s26, 3
      %p105 = por %p103, %p104
      %p106 = scmp.ne.s32.totalorder %s97, %s98
      %p107 = scmp.eq.s32.totalorder %s26, 0
      %p108 = por %p106, %p107
      %p109 = scmp.ne.s32.totalorder %s97, %s98
      %p110 = scmp.eq.s32.totalorder %s27, 3
      %p111 = por %p109, %p110
      %p113 = scmp.ne.s32.totalorder %s98, %s112
      %p114 = scmp.eq.s32.totalorder %s27, 0
      %p115 = por %p113, %p114
      %s117 = sadd.s32 %s116, 1
      %p120 = scmp.eq.s32.totalorder %s21, 3
      %p121 = scmp.ne.s32.totalorder %s116, %s118
      %p122 = scmp.eq.s32.totalorder %s21, 0
      %p123 = por %p121, %p122
      %p124 = scmp.ne.s32.totalorder %s116, %s118
      %p125 = scmp.eq.s32.totalorder %s26, 3
      %p126 = por %p124, %p125
      %p127 = scmp.ne.s32.totalorder %s118, %s119
      %p128 = scmp.eq.s32.totalorder %s26, 0
      %p129 = por %p127, %p128
      %p130 = scmp.ne.s32.totalorder %s118, %s119
      %p131 = scmp.eq.s32.totalorder %s27, 3
      %p132 = por %p130, %p131
      %p134 = scmp.ne.s32.totalorder %s119, %s133
      %p135 = scmp.eq.s32.totalorder %s27, 0
      %p136 = por %p134, %p135
      %s138 = sadd.s32 %s137, 1
      %p141 = scmp.eq.s32.totalorder %s21, 3
      %p142 = scmp.ne.s32.totalorder %s137, %s139
      %p143 = scmp.eq.s32.totalorder %s21, 0
      %p144 = por %p142, %p143
      %p145 = scmp.ne.s32.totalorder %s137, %s139
      %p146 = scmp.eq.s32.totalorder %s26, 3
      %p147 = por %p145, %p146
      %p148 = scmp.ne.s32.totalorder %s139, %s140
      %p149 = scmp.eq.s32.totalorder %s26, 0
      %p150 = por %p148, %p149
      %p151 = scmp.ne.s32.totalorder %s139, %s140
      %p152 = scmp.eq.s32.totalorder %s27, 3
      %p153 = por %p151, %p152
      %p155 = scmp.ne.s32.totalorder %s140, %s154
      %p156 = scmp.eq.s32.totalorder %s27, 0
      %p157 = por %p155, %p156
      %s159 = sadd.s32 %s158, 1
      %p162 = scmp.eq.s32.totalorder %s21, 3
      %p163 = scmp.ne.s32.totalorder %s158, %s160
      %p164 = scmp.eq.s32.totalorder %s21, 0
      %p165 = por %p163, %p164
      %p166 = scmp.ne.s32.totalorder %s158, %s160
      %p167 = scmp.eq.s32.totalorder %s26, 3
      %p168 = por %p166, %p167
      %p169 = scmp.ne.s32.totalorder %s160, %s161
      %p170 = scmp.eq.s32.totalorder %s26, 0
      %p171 = por %p169, %p170
      %p172 = scmp.ne.s32.totalorder %s160, %s161
      %p173 = scmp.eq.s32.totalorder %s27, 3
      %p174 = por %p172, %p173
      %p176 = scmp.ne.s32.totalorder %s161, %s175
      %p177 = scmp.eq.s32.totalorder %s27, 0
      %p178 = por %p176, %p177
      %s180 = sadd.s32 %s179, 1
      %p183 = scmp.eq.s32.totalorder %s21, 3
      %p184 = scmp.ne.s32.totalorder %s179, %s181
      %p185 = scmp.eq.s32.totalorder %s21, 0
      %p186 = por %p184, %p185
      %p187 = scmp.ne.s32.totalorder %s179, %s181
      %p188 = scmp.eq.s32.totalorder %s26, 3
      %p189 = por %p187, %p188
      %p190 = scmp.ne.s32.totalorder %s181, %s182
      %p191 = scmp.eq.s32.totalorder %s26, 0
      %p192 = por %p190, %p191
      %p193 = scmp.ne.s32.totalorder %s181, %s182
      %p194 = scmp.eq.s32.totalorder %s27, 3
      %p195 = por %p193, %p194
      %p197 = scmp.ne.s32.totalorder %s182, %s196
      %p198 = scmp.eq.s32.totalorder %s27, 0
      %p199 = por %p197, %p198
      %s201 = sadd.s32 %s200, 1
      %p204 = scmp.eq.s32.totalorder %s21, 3
      %p205 = scmp.ne.s32.totalorder %s200, %s202
      %p206 = scmp.eq.s32.totalorder %s21, 0
      %p207 = por %p205, %p206
      %p208 = scmp.ne.s32.totalorder %s200, %s202
      %p209 = scmp.eq.s32.totalorder %s26, 3
      %p210 = por %p208, %p209
      %p211 = scmp.ne.s32.totalorder %s202, %s203
      %p212 = scmp.eq.s32.totalorder %s26, 0
      %p213 = por %p211, %p212
      %p214 = scmp.ne.s32.totalorder %s202, %s203
      %p215 = scmp.eq.s32.totalorder %s27, 3
      %p216 = por %p214, %p215
      %p218 = scmp.ne.s32.totalorder %s203, %s217
      %p219 = scmp.eq.s32.totalorder %s27, 0
      %p220 = por %p218, %p219
      %s222 = sadd.s32 %s221, 1
      %p225 = scmp.eq.s32.totalorder %s21, 3
      %p226 = scmp.ne.s32.totalorder %s221, %s223
      %p227 = scmp.eq.s32.totalorder %s21, 0
      %p228 = por %p226, %p227
      %p229 = scmp.ne.s32.totalorder %s221, %s223
      %p230 = scmp.eq.s32.totalorder %s26, 3
      %p231 = por %p229, %p230
      %p232 = scmp.ne.s32.totalorder %s223, %s224
      %p233 = scmp.eq.s32.totalorder %s26, 0
      %p234 = por %p232, %p233
      %p235 = scmp.ne.s32.totalorder %s223, %s224
      %p236 = scmp.eq.s32.totalorder %s27, 3
      %p237 = por %p235, %p236
      %p239 = scmp.ne.s32.totalorder %s224, %s238
      %p240 = scmp.eq.s32.totalorder %s27, 0
      %p241 = por %p239, %p240
      %s243 = sadd.s32 %s242, 1
      %p246 = scmp.eq.s32.totalorder %s21, 3
      %p247 = scmp.ne.s32.totalorder %s242, %s244
      %p248 = scmp.eq.s32.totalorder %s21, 0
      %p249 = por %p247, %p248
      %p250 = scmp.ne.s32.totalorder %s242, %s244
      %p251 = scmp.eq.s32.totalorder %s26, 3
      %p252 = por %p250, %p251
      %p253 = scmp.ne.s32.totalorder %s244, %s245
      %p254 = scmp.eq.s32.totalorder %s26, 0
      %p255 = por %p253, %p254
      %p256 = scmp.ne.s32.totalorder %s244, %s245
      %p257 = scmp.eq.s32.totalorder %s27, 3
      %p258 = por %p256, %p257
      %p260 = scmp.ne.s32.totalorder %s245, %s259
      %p261 = scmp.eq.s32.totalorder %s27, 0
      %p262 = por %p260, %p261
      %s264 = sadd.s32 %s263, 1
      %p267 = scmp.eq.s32.totalorder %s21, 3
      %p268 = scmp.ne.s32.totalorder %s263, %s265
      %p269 = scmp.eq.s32.totalorder %s21, 0
      %p270 = por %p268, %p269
      %p271 = scmp.ne.s32.totalorder %s263, %s265
      %p272 = scmp.eq.s32.totalorder %s26, 3
      %p273 = por %p271, %p272
      %p274 = scmp.ne.s32.totalorder %s265, %s266
      %p275 = scmp.eq.s32.totalorder %s26, 0
      %p276 = por %p274, %p275
      %p277 = scmp.ne.s32.totalorder %s265, %s266
      %p278 = scmp.eq.s32.totalorder %s27, 3
      %p279 = por %p277, %p278
      %p281 = scmp.ne.s32.totalorder %s266, %s280
      %p282 = scmp.eq.s32.totalorder %s27, 0
      %p283 = por %p281, %p282
      %s285 = sadd.s32 %s284, 1
      %p288 = scmp.eq.s32.totalorder %s21, 3
      %p289 = scmp.ne.s32.totalorder %s284, %s286
      %p290 = scmp.eq.s32.totalorder %s21, 0
      %p291 = por %p289, %p290
      %p292 = scmp.ne.s32.totalorder %s284, %s286
      %p293 = scmp.eq.s32.totalorder %s26, 3
      %p294 = por %p292, %p293
      %p295 = scmp.ne.s32.totalorder %s286, %s287
      %p296 = scmp.eq.s32.totalorder %s26, 0
      %p297 = por %p295, %p296
      %p298 = scmp.ne.s32.totalorder %s286, %s287
      %p299 = scmp.eq.s32.totalorder %s27, 3
      %p300 = por %p298, %p299
      %p302 = scmp.ne.s32.totalorder %s287, %s301
      %p303 = scmp.eq.s32.totalorder %s27, 0
      %p304 = por %p302, %p303
      %s305 = ssub.s32 %s28, %s40
      %s306 = ssub.s32 %s29, %s36
      %s307 = sor.u32 %s305, %s306
      %p308 = scmp.eq.s32.totalorder %s307, 0
      %s310 = sadd.s32 %s309, 1
      %s311 = scalar_select %p308, %s309, %s310
      %p314 = pneg %p308
      %p315 = scmp.eq.s32.totalorder %s21, 3
      %p316 = por %p314, %p315
      %p317 = scmp.ne.s32.totalorder %s309, %s312
      %p318 = scmp.eq.s32.totalorder %s21, 0
      %p319 = por %p317, %p318
      %p320 = scmp.ne.s32.totalorder %s309, %s312
      %p321 = scmp.eq.s32.totalorder %s26, 3
      %p322 = por %p320, %p321
      %p323 = scmp.ne.s32.totalorder %s312, %s313
      %p324 = scmp.eq.s32.totalorder %s26, 0
      %p325 = por %p323, %p324
      %p326 = scmp.ne.s32.totalorder %s312, %s313
      %p327 = scmp.eq.s32.totalorder %s27, 3
      %p328 = por %p326, %p327
      %p330 = scmp.ne.s32.totalorder %s313, %s329
      %p331 = scmp.eq.s32.totalorder %s27, 0
      %p332 = por %p330, %p331
      %p333 = scmp.le.s32.totalorder 1, %s21
      %p334 = scmp.lt.s32.totalorder %s21, 5
      %p335 = pnand %p333, %p334
      %p336 = pneg %p335
      // Predicated region
      $region9: #{tpu_custom_call.1} parent=5 // pred_check
        _
      $region10: #{tpu_custom_call.1} parent=5 // pred_check_branch
        %338 = sbr.rel (%p335) target = $region12
      $region11: #{tpu_custom_call.1} parent=5 // pred_region
        %s339 = ssub.s32 %s21, 1
        // Predicated region
        $region13: #{tpu_custom_call.1} parent=11 // pred_check
          %p340 = pneg %p108
        $region14: #{tpu_custom_call.1} parent=11 // pred_check_branch
          %342 = sbr.rel (%p340) target = $region16
        $region15: #{tpu_custom_call.1} parent=11 // pred_region
          _
        $region16: #{tpu_custom_call.1} parent=11 // pred_fallthru
          _
        // Predicated region
        $region17: #{tpu_custom_call.1} parent=11 // pred_check
          %p343 = pneg %p129
        $region18: #{tpu_custom_call.1} parent=11 // pred_check_branch
          %345 = sbr.rel (%p343) target = $region20
        $region19: #{tpu_custom_call.1} parent=11 // pred_region
          _
        $region20: #{tpu_custom_call.1} parent=11 // pred_fallthru
          _
        // Predicated region
        $region21: #{tpu_custom_call.1} parent=11 // pred_check
          %p346 = pneg %p150
        $region22: #{tpu_custom_call.1} parent=11 // pred_check_branch
          %348 = sbr.rel (%p346) target = $region24
        $region23: #{tpu_custom_call.1} parent=11 // pred_region
          _
        $region24: #{tpu_custom_call.1} parent=11 // pred_fallthru
          _
        // Predicated region
        $region25: #{tpu_custom_call.1} parent=11 // pred_check
          %p349 = pneg %p171
        $region26: #{tpu_custom_call.1} parent=11 // pred_check_branch
          %351 = sbr.rel (%p349) target = $region28
        $region27: #{tpu_custom_call.1} parent=11 // pred_region
          _
        $region28: #{tpu_custom_call.1} parent=11 // pred_fallthru
          _
        // Predicated region
        $region29: #{tpu_custom_call.1} parent=11 // pred_check
          %p352 = pneg %p192
        $region30: #{tpu_custom_call.1} parent=11 // pred_check_branch
          %354 = sbr.rel (%p352) target = $region32
        $region31: #{tpu_custom_call.1} parent=11 // pred_region
          _
        $region32: #{tpu_custom_call.1} parent=11 // pred_fallthru
          _
        // Predicated region
        $region33: #{tpu_custom_call.1} parent=11 // pred_check
          %p355 = pneg %p213
        $region34: #{tpu_custom_call.1} parent=11 // pred_check_branch
          %357 = sbr.rel (%p355) target = $region36
        $region35: #{tpu_custom_call.1} parent=11 // pred_region
          _
        $region36: #{tpu_custom_call.1} parent=11 // pred_fallthru
          _
        // Predicated region
        $region37: #{tpu_custom_call.1} parent=11 // pred_check
          %p358 = pneg %p234
        $region38: #{tpu_custom_call.1} parent=11 // pred_check_branch
          %360 = sbr.rel (%p358) target = $region40
        $region39: #{tpu_custom_call.1} parent=11 // pred_region
          _
        $region40: #{tpu_custom_call.1} parent=11 // pred_fallthru
          _
        // Predicated region
        $region41: #{tpu_custom_call.1} parent=11 // pred_check
          %p361 = pneg %p255
        $region42: #{tpu_custom_call.1} parent=11 // pred_check_branch
          %363 = sbr.rel (%p361) target = $region44
        $region43: #{tpu_custom_call.1} parent=11 // pred_region
          _
        $region44: #{tpu_custom_call.1} parent=11 // pred_fallthru
          _
        // Predicated region
        $region45: #{tpu_custom_call.1} parent=11 // pred_check
          %p364 = pneg %p276
        $region46: #{tpu_custom_call.1} parent=11 // pred_check_branch
          %366 = sbr.rel (%p364) target = $region48
        $region47: #{tpu_custom_call.1} parent=11 // pred_region
          _
        $region48: #{tpu_custom_call.1} parent=11 // pred_fallthru
          _
        // Predicated region
        $region49: #{tpu_custom_call.1} parent=11 // pred_check
          %p367 = pneg %p297
        $region50: #{tpu_custom_call.1} parent=11 // pred_check_branch
          %369 = sbr.rel (%p367) target = $region52
        $region51: #{tpu_custom_call.1} parent=11 // pred_region
          _
        $region52: #{tpu_custom_call.1} parent=11 // pred_fallthru
          _
      $region12: #{tpu_custom_call.1} parent=5 // pred_fallthru
        _
      %p370 = scmp.lt.s32.totalorder %s21, 4
      // Predicated region
      $region53: #{tpu_custom_call.1} parent=5 // pred_check
        %p371 = pneg %p370
      $region54: #{tpu_custom_call.1} parent=5 // pred_check_branch
        %373 = sbr.rel (%p371) target = $region56
      $region55: #{tpu_custom_call.1} parent=5 // pred_region
        // Predicated region
        $region57: #{tpu_custom_call.1} parent=55 // pred_check
          %p374 = pneg %p53
        $region58: #{tpu_custom_call.1} parent=55 // pred_check_branch
          %376 = sbr.rel (%p374) target = $region60
        $region59: #{tpu_custom_call.1} parent=55 // pred_region
          %p377 = scmp.lt.s32.totalorder %s28, 1
          %s378 = scalar_select %p377, %s28, 1
          %s379 = smul.addr %s378, 2
          %s380 = smul.addr %s379, 4
          %s381 = scalar_lea.vmem %s0, %s380
        $region60: #{tpu_custom_call.1} parent=55 // pred_fallthru
          _
        // Predicated region
        $region61: #{tpu_custom_call.1} parent=55 // pred_check
          %p382 = pneg %p81
        $region62: #{tpu_custom_call.1} parent=55 // pred_check_branch
          %384 = sbr.rel (%p382) target = $region64
        $region63: #{tpu_custom_call.1} parent=55 // pred_region
          %p385 = scmp.lt.s32.totalorder %s28, 1
          %s386 = scalar_select %p385, %s28, 1
          %p387 = scmp.lt.s32.totalorder %s29, 1
          %s388 = scalar_select %p387, %s29, 1
          %s389 = smul.addr %s386, 2
          %s390 = sadd.s32 %s388, %s389
          %s391 = smul.addr %s390, 4
          %s392 = scalar_lea.vmem %s1, %s391
        $region64: #{tpu_custom_call.1} parent=55 // pred_fallthru
          _
      $region56: #{tpu_custom_call.1} parent=5 // pred_fallthru
        _
      %p393 = scmp.le.s32.totalorder 1, %s21
      %p394 = scmp.lt.s32.totalorder %s21, 5
      %p395 = pnand %p393, %p394
      %p396 = pneg %p395
      // Predicated region
      $region65: #{tpu_custom_call.1} parent=5 // pred_check
        _
      $region66: #{tpu_custom_call.1} parent=5 // pred_check_branch
        %398 = sbr.rel (%p395) target = $region68
      $region67: #{tpu_custom_call.1} parent=5 // pred_region
        %s399 = ssub.s32 %s21, 1
        %p400 = scmp.lt.s32.totalorder %s30, 1
        %s401 = scalar_select %p400, %s30, 1
        %s402 = smul.addr %s401, 2
        %s403 = smul.addr %s402, 4
        %s404 = scalar_lea.vmem %s0, %s403
        %p405 = pneg %p59
        %p406 = pneg %p56
        %p407 = scmp.lt.s32.totalorder %s30, 1
        %s408 = scalar_select %p407, %s30, 1
        %p409 = scmp.lt.s32.totalorder %s31, 1
        %s410 = scalar_select %p409, %s31, 1
        %s411 = smul.addr %s408, 2
        %s412 = sadd.s32 %s410, %s411
        %s413 = smul.addr %s412, 4
        %s414 = scalar_lea.vmem %s1, %s413
        %p415 = pneg %p87
        %p416 = pneg %p84
        %p417 = pneg %p108
        %p418 = pneg %p105
        %p419 = pneg %p129
        %p420 = pneg %p126
        %p421 = pneg %p150
        %p422 = pneg %p147
        %p423 = pneg %p171
        %p424 = pneg %p168
        %p425 = pneg %p192
        %p426 = pneg %p189
        %p427 = pneg %p213
        %p428 = pneg %p210
        %p429 = pneg %p234
        %p430 = pneg %p231
        %p431 = pneg %p255
        %p432 = pneg %p252
        %p433 = pneg %p276
        %p434 = pneg %p273
        %p435 = pneg %p297
        %p436 = pneg %p294
        %p437 = pneg %p325
        %p438 = pneg %p322
        %s439 = sand.u32 %s312, 1
        %s440 = scalar_lea.sflag [#allocation4], %s439
        %s441 = sand.u32 %s312, 1
        %s442 = smul.addr %s441, 4
        %s443 = scalar_lea.vmem [#allocation3], %s442
        %p444 = scmp.lt.s32.totalorder %s30, 1
        %s445 = scalar_select %p444, %s30, 1
        %s446 = smul.addr %s445, 2
        %s447 = smul.addr %s446, 4
        %s448 = scalar_lea.vmem %s0, %s447
        %p449 = scmp.lt.s32.totalorder %s30, 1
        %s450 = scalar_select %p449, %s30, 1
        %p451 = scmp.lt.s32.totalorder %s31, 1
        %s452 = scalar_select %p451, %s31, 1
        %s453 = smul.addr %s450, 2
        %s454 = sadd.s32 %s452, %s453
        %s455 = smul.addr %s454, 4
        %s456 = scalar_lea.vmem %s1, %s455
        %p457 = scmp.eq.s32.totalorder %s31, 0
        // Predicated region
        $region69: #{tpu_custom_call.1} parent=67 // pred_check
          %p458 = pneg %p457
        $region70: #{tpu_custom_call.1} parent=67 // pred_check_branch
          %460 = sbr.rel (%p458) target = $region72
        $region71: #{tpu_custom_call.1} parent=67 // pred_region
          %v461 = vld [vmem:[%s448] sm:$0xff]
          %v462 = vld [vmem:[%s2] sm:$0xff]
          %v463 = vld [vmem:[%s3] sm:$0xff]
          %465 = vset.pattern.permute.xlu0 0
          %466 = vperm.xlu0 %465, %v463
          %v467 = vpop.permute.xlu0 %466
          %v470 = vcombine.high %v461, %v461
          %vm471 = vcmask 31744
          %v473 = vsel %vm471, %v462, 0
          %vm475 = vcmask 1043456
          %v476 = vsel %vm475, %v461, 0
          %v478 = vsel %vm475, %v470, 0
          %480 = vmatprep.subr.mxu0 0.0
          %481 = vmatpush1.msra.mxu0 0.0
          %482 = vmatprep.subr.mxu0 0.0
          %483 = vmatpush1.msra.mxu0 0.0
          %484 = vmatprep.subr.mxu0 0.0
          %485 = vmatpush1.msra.mxu0 0.0
          %486 = vmatprep.subr.mxu0 0.0
          %487 = vmatpush1.msra.mxu0 0.0
          %488 = vmatprep.subr.mxu0 0.0
          %489 = vmatpush1.msra.mxu0 0.0
          %490 = vmatprep.subr.mxu0 0.0
          %491 = vmatpush1.msra.mxu0 0.0
          %492 = vmatprep.subr.mxu0 0.0
          %493 = vmatpush1.msra.mxu0 0.0
          %494 = vmatprep.subr.mxu0 0.0
          %495 = vmatpush1.msra.mxu0 0.0
          %496 = vmatprep.subr.mxu0 0.0
          %497 = vmatpush1.msra.mxu0 0.0
          %498 = vmatprep.subr.mxu0 0.0
          %499 = vmatpush1.msra.mxu0 0.0
          %500 = vmatprep.subr.mxu0 0.0
          %501 = vmatpush1.msra.mxu0 0.0
          %502 = vmatprep.subr.mxu0 0.0
          %503 = vmatpush1.msra.mxu0 0.0
          %504 = vmatprep.subr.mxu0 0.0
          %505 = vmatpush1.msra.mxu0 0.0
          %506 = vmatprep.subr.mxu0 0.0
          %507 = vmatpush1.msra.mxu0 0.0
          %508 = vmatprep.subr.mxu0 0.0
          %509 = vmatpush1.msra.mxu0 0.0
          %510 = vmatprep.subr.mxu0 %v478
          %511 = vmatpush1.msra.mxu0 %v476
          %512 = vmatprep.subr.mxu0 0.0
          %513 = vmatpush2.msra.mxu0 0.0
          %514 = vmatprep.subr.mxu0 0.0
          %515 = vmatpush2.msra.mxu0 0.0
          %516 = vmatprep.subr.mxu0 0.0
          %517 = vmatpush2.msra.mxu0 0.0
          %518 = vmatprep.subr.mxu0 0.0
          %519 = vmatpush2.msra.mxu0 0.0
          %520 = vmatprep.subr.mxu0 0.0
          %521 = vmatpush2.msra.mxu0 0.0
          %522 = vmatprep.subr.mxu0 0.0
          %523 = vmatpush2.msra.mxu0 0.0
          %524 = vmatprep.subr.mxu0 0.0
          %525 = vmatpush2.msra.mxu0 0.0
          %526 = vmatprep.subr.mxu0 0.0
          %527 = vmatpush2.msra.mxu0 0.0
          %528 = vmatprep.subr.mxu0 0.0
          %529 = vmatpush2.msra.mxu0 0.0
          %530 = vmatprep.subr.mxu0 0.0
          %531 = vmatpush2.msra.mxu0 0.0
          %532 = vmatprep.subr.mxu0 0.0
          %533 = vmatpush2.msra.mxu0 0.0
          %534 = vmatprep.subr.mxu0 0.0
          %535 = vmatpush2.msra.mxu0 0.0
          %536 = vmatprep.subr.mxu0 0.0
          %537 = vmatpush2.msra.mxu0 0.0
          %538 = vmatprep.subr.mxu0 0.0
          %539 = vmatpush2.msra.mxu0 0.0
          %540 = vmatprep.subr.mxu0 0.0
          %541 = vmatpush2.msra.mxu0 0.0
          %542 = vmatprep.subr.mxu0 0.0
          %543 = vmatpush2.msra.mxu0 0.0
          %544 = vmatprep.mubr.f32.mxu0 0.0
          %545 = vmatmul.mubr.f32.gmra.mxu0 %v473
          %v546 = vpop.f32.mrf.mxu0
          %v547 = vadd.f32 %v467, %v546
          %v548 = vpop.f32.mrf.mxu0
          %v549 = vadd.f32 %v467, %v548
          %550 = vdwg.mxu0
          %v551 = vld [vmem:[%s6] sm:$0xff]
          %v552 = vld [vmem:[%s7] sm:$0xff]
          %554 = vset.pattern.permute.xlu0 0
          %555 = vperm.xlu0 %554, %v552
          %v556 = vpop.permute.xlu0 %555
          %v559 = vsel %vm471, %v551, 0
          %561 = vmatprep.subr.mxu0 0.0
          %562 = vmatpush1.msra.mxu0 0.0
          %563 = vmatprep.subr.mxu0 0.0
          %564 = vmatpush1.msra.mxu0 0.0
          %565 = vmatprep.subr.mxu0 0.0
          %566 = vmatpush1.msra.mxu0 0.0
          %567 = vmatprep.subr.mxu0 0.0
          %568 = vmatpush1.msra.mxu0 0.0
          %569 = vmatprep.subr.mxu0 0.0
          %570 = vmatpush1.msra.mxu0 0.0
          %571 = vmatprep.subr.mxu0 0.0
          %572 = vmatpush1.msra.mxu0 0.0
          %573 = vmatprep.subr.mxu0 0.0
          %574 = vmatpush1.msra.mxu0 0.0
          %575 = vmatprep.subr.mxu0 0.0
          %576 = vmatpush1.msra.mxu0 0.0
          %577 = vmatprep.subr.mxu0 0.0
          %578 = vmatpush1.msra.mxu0 0.0
          %579 = vmatprep.subr.mxu0 0.0
          %580 = vmatpush1.msra.mxu0 0.0
          %581 = vmatprep.subr.mxu0 0.0
          %582 = vmatpush1.msra.mxu0 0.0
          %583 = vmatprep.subr.mxu0 0.0
          %584 = vmatpush1.msra.mxu0 0.0
          %585 = vmatprep.subr.mxu0 0.0
          %586 = vmatpush1.msra.mxu0 0.0
          %587 = vmatprep.subr.mxu0 0.0
          %588 = vmatpush1.msra.mxu0 0.0
          %589 = vmatprep.subr.mxu0 0.0
          %590 = vmatpush1.msra.mxu0 0.0
          %591 = vmatprep.subr.mxu0 %v478
          %592 = vmatpush1.msra.mxu0 %v476
          %593 = vmatprep.subr.mxu0 0.0
          %594 = vmatpush2.msra.mxu0 0.0
          %595 = vmatprep.subr.mxu0 0.0
          %596 = vmatpush2.msra.mxu0 0.0
          %597 = vmatprep.subr.mxu0 0.0
          %598 = vmatpush2.msra.mxu0 0.0
          %599 = vmatprep.subr.mxu0 0.0
          %600 = vmatpush2.msra.mxu0 0.0
          %601 = vmatprep.subr.mxu0 0.0
          %602 = vmatpush2.msra.mxu0 0.0
          %603 = vmatprep.subr.mxu0 0.0
          %604 = vmatpush2.msra.mxu0 0.0
          %605 = vmatprep.subr.mxu0 0.0
          %606 = vmatpush2.msra.mxu0 0.0
          %607 = vmatprep.subr.mxu0 0.0
          %608 = vmatpush2.msra.mxu0 0.0
          %609 = vmatprep.subr.mxu0 0.0
          %610 = vmatpush2.msra.mxu0 0.0
          %611 = vmatprep.subr.mxu0 0.0
          %612 = vmatpush2.msra.mxu0 0.0
          %613 = vmatprep.subr.mxu0 0.0
          %614 = vmatpush2.msra.mxu0 0.0
          %615 = vmatprep.subr.mxu0 0.0
          %616 = vmatpush2.msra.mxu0 0.0
          %617 = vmatprep.subr.mxu0 0.0
          %618 = vmatpush2.msra.mxu0 0.0
          %619 = vmatprep.subr.mxu0 0.0
          %620 = vmatpush2.msra.mxu0 0.0
          %621 = vmatprep.subr.mxu0 0.0
          %622 = vmatpush2.msra.mxu0 0.0
          %623 = vmatprep.subr.mxu0 0.0
          %624 = vmatpush2.msra.mxu0 0.0
          %625 = vmatprep.mubr.f32.mxu0 0.0
          %626 = vmatmul.mubr.f32.gmra.mxu0 %v559
          %v627 = vpop.f32.mrf.mxu0
          %v628 = vadd.f32 %v556, %v627
          %v629 = vpop.f32.mrf.mxu0
          %v630 = vadd.f32 %v556, %v629
          %631 = vdwg.mxu0
          %v632 = vmax.f32 %v547, %v549
          %633 = vmax.xlane.f32.xlu0 %v632
          %v634 = vpop.xlane.xlu0 %633
          %v635 = vsub.f32 %v547, %v634
          %v636 = vsub.f32 %v549, %v634
          %v637 = vmul.f32 %v635, 1.442695
          %v638 = vpow.pop %v637
          %v639 = vmul.f32 %v636, 1.442695
          %v640 = vpow.pop %v639
          %v641 = vadd.f32 %v638, %v640
          %642 = vadd.xlane.f32.xlu0 %v641
          %v643 = vpop.xlane.xlu0 %642
          %v644 = vrcp.pop %v643
          %v645 = vmul.f32 %v638, %v644
          %v646 = vmul.f32 %v640, %v644
          %647 = vmatprep.subr.mxu0 0.0
          %648 = vmatpush1.xpose.msra.mxu0 0.0
          %649 = vmatprep.subr.mxu0 0.0
          %650 = vmatpush1.xpose.msra.mxu0 0.0
          %651 = vmatprep.subr.mxu0 0.0
          %652 = vmatpush1.xpose.msra.mxu0 0.0
          %653 = vmatprep.subr.mxu0 0.0
          %654 = vmatpush1.xpose.msra.mxu0 0.0
          %655 = vmatprep.subr.mxu0 0.0
          %656 = vmatpush1.xpose.msra.mxu0 0.0
          %657 = vmatprep.subr.mxu0 0.0
          %658 = vmatpush1.xpose.msra.mxu0 0.0
          %659 = vmatprep.subr.mxu0 0.0
          %660 = vmatpush1.xpose.msra.mxu0 0.0
          %661 = vmatprep.subr.mxu0 0.0
          %662 = vmatpush1.xpose.msra.mxu0 0.0
          %663 = vmatprep.subr.mxu0 0.0
          %664 = vmatpush1.xpose.msra.mxu0 0.0
          %665 = vmatprep.subr.mxu0 0.0
          %666 = vmatpush1.xpose.msra.mxu0 0.0
          %667 = vmatprep.subr.mxu0 0.0
          %668 = vmatpush1.xpose.msra.mxu0 0.0
          %669 = vmatprep.subr.mxu0 0.0
          %670 = vmatpush1.xpose.msra.mxu0 0.0
          %671 = vmatprep.subr.mxu0 0.0
          %672 = vmatpush1.xpose.msra.mxu0 0.0
          %673 = vmatprep.subr.mxu0 0.0
          %674 = vmatpush1.xpose.msra.mxu0 0.0
          %675 = vmatprep.subr.mxu0 0.0
          %676 = vmatpush1.xpose.msra.mxu0 0.0
          %677 = vmatprep.subr.mxu0 %v630
          %678 = vmatpush1.xpose.msra.mxu0 %v628
          %679 = vmatprep.subr.mxu0 0.0
          %680 = vmatpush2.xpose.msra.mxu0 0.0
          %681 = vmatprep.subr.mxu0 0.0
          %682 = vmatpush2.xpose.msra.mxu0 0.0
          %683 = vmatprep.subr.mxu0 0.0
          %684 = vmatpush2.xpose.msra.mxu0 0.0
          %685 = vmatprep.subr.mxu0 0.0
          %686 = vmatpush2.xpose.msra.mxu0 0.0
          %687 = vmatprep.subr.mxu0 0.0
          %688 = vmatpush2.xpose.msra.mxu0 0.0
          %689 = vmatprep.subr.mxu0 0.0
          %690 = vmatpush2.xpose.msra.mxu0 0.0
          %691 = vmatprep.subr.mxu0 0.0
          %692 = vmatpush2.xpose.msra.mxu0 0.0
          %693 = vmatprep.subr.mxu0 0.0
          %694 = vmatpush2.xpose.msra.mxu0 0.0
          %695 = vmatprep.subr.mxu0 0.0
          %696 = vmatpush2.xpose.msra.mxu0 0.0
          %697 = vmatprep.subr.mxu0 0.0
          %698 = vmatpush2.xpose.msra.mxu0 0.0
          %699 = vmatprep.subr.mxu0 0.0
          %700 = vmatpush2.xpose.msra.mxu0 0.0
          %701 = vmatprep.subr.mxu0 0.0
          %702 = vmatpush2.xpose.msra.mxu0 0.0
          %703 = vmatprep.subr.mxu0 0.0
          %704 = vmatpush2.xpose.msra.mxu0 0.0
          %705 = vmatprep.subr.mxu0 0.0
          %706 = vmatpush2.xpose.msra.mxu0 0.0
          %707 = vmatprep.subr.mxu0 0.0
          %708 = vmatpush2.xpose.msra.mxu0 0.0
          %709 = vmatprep.subr.mxu0 0.0
          %710 = vmatpush2.xpose.msra.mxu0 0.0
          %711 = vmatprep.mubr.f32.mxu0 %v646
          %712 = vmatmul.mubr.f32.gmra.mxu0 %v645
          %v713 = vpop.f32.mrf.mxu0
          %v714 = vadd.f32 0.0, %v713
          %v715 = vpop.f32.mrf.mxu0
          %716 = vdwg.mxu0
          %v717 = vld [vmem:[%s10] sm:$0xff]
          %v718 = vmul.f32 %v714, %v717
          %vm719 = vcmask 64512
          %720 = vst.msk [vmem:[#allocation2] sm:$0xff] %vm719, %v718
        $region72: #{tpu_custom_call.1} parent=67 // pred_fallthru
          _
        %v721 = vld [vmem:[%s456] sm:$0xf]
        %v722 = vld [vmem:[%s4] sm:$0xff]
        %v723 = vld [vmem:[%s5] sm:$0xff]
        %725 = vset.pattern.permute.xlu0 0
        %726 = vperm.xlu0 %725, %v723
        %v727 = vpop.permute.xlu0 %726
        %vm729 = vcmask 31744
        %v731 = vsel %vm729, %v722, 0
        %vm733 = vcmask 1043456
        %v735 = vsel %vm733, %v721, 0
        %737 = vmatprep.subr.mxu0 0.0
        %738 = vmatpush1.msra.mxu0 0.0
        %739 = vmatprep.subr.mxu0 0.0
        %740 = vmatpush1.msra.mxu0 0.0
        %741 = vmatprep.subr.mxu0 0.0
        %742 = vmatpush1.msra.mxu0 0.0
        %743 = vmatprep.subr.mxu0 0.0
        %744 = vmatpush1.msra.mxu0 0.0
        %745 = vmatprep.subr.mxu0 0.0
        %746 = vmatpush1.msra.mxu0 0.0
        %747 = vmatprep.subr.mxu0 0.0
        %748 = vmatpush1.msra.mxu0 0.0
        %749 = vmatprep.subr.mxu0 0.0
        %750 = vmatpush1.msra.mxu0 0.0
        %751 = vmatprep.subr.mxu0 0.0
        %752 = vmatpush1.msra.mxu0 0.0
        %753 = vmatprep.subr.mxu0 0.0
        %754 = vmatpush1.msra.mxu0 0.0
        %755 = vmatprep.subr.mxu0 0.0
        %756 = vmatpush1.msra.mxu0 0.0
        %757 = vmatprep.subr.mxu0 0.0
        %758 = vmatpush1.msra.mxu0 0.0
        %759 = vmatprep.subr.mxu0 0.0
        %760 = vmatpush1.msra.mxu0 0.0
        %761 = vmatprep.subr.mxu0 0.0
        %762 = vmatpush1.msra.mxu0 0.0
        %763 = vmatprep.subr.mxu0 0.0
        %764 = vmatpush1.msra.mxu0 0.0
        %765 = vmatprep.subr.mxu0 0.0
        %766 = vmatpush1.msra.mxu0 0.0
        %767 = vmatprep.subr.mxu0 0.0
        %768 = vmatpush1.msra.mxu0 %v735
        %769 = vmatprep.subr.mxu0 0.0
        %770 = vmatpush2.msra.mxu0 0.0
        %771 = vmatprep.subr.mxu0 0.0
        %772 = vmatpush2.msra.mxu0 0.0
        %773 = vmatprep.subr.mxu0 0.0
        %774 = vmatpush2.msra.mxu0 0.0
        %775 = vmatprep.subr.mxu0 0.0
        %776 = vmatpush2.msra.mxu0 0.0
        %777 = vmatprep.subr.mxu0 0.0
        %778 = vmatpush2.msra.mxu0 0.0
        %779 = vmatprep.subr.mxu0 0.0
        %780 = vmatpush2.msra.mxu0 0.0
        %781 = vmatprep.subr.mxu0 0.0
        %782 = vmatpush2.msra.mxu0 0.0
        %783 = vmatprep.subr.mxu0 0.0
        %784 = vmatpush2.msra.mxu0 0.0
        %785 = vmatprep.subr.mxu0 0.0
        %786 = vmatpush2.msra.mxu0 0.0
        %787 = vmatprep.subr.mxu0 0.0
        %788 = vmatpush2.msra.mxu0 0.0
        %789 = vmatprep.subr.mxu0 0.0
        %790 = vmatpush2.msra.mxu0 0.0
        %791 = vmatprep.subr.mxu0 0.0
        %792 = vmatpush2.msra.mxu0 0.0
        %793 = vmatprep.subr.mxu0 0.0
        %794 = vmatpush2.msra.mxu0 0.0
        %795 = vmatprep.subr.mxu0 0.0
        %796 = vmatpush2.msra.mxu0 0.0
        %797 = vmatprep.subr.mxu0 0.0
        %798 = vmatpush2.msra.mxu0 0.0
        %799 = vmatprep.subr.mxu0 0.0
        %800 = vmatpush2.msra.mxu0 0.0
        %801 = vmatprep.mubr.f32.mxu0 0.0
        %802 = vmatmul.mubr.f32.gmra.mxu0 %v731
        %v803 = vpop.f32.mrf.mxu0
        %v804 = vadd.f32 %v727, %v803
        %v805 = vpop.f32.mrf.mxu0
        %806 = vdwg.mxu0
        %v807 = vrot.slane %v804, 4
        %v808 = vmax.f32 %v804, %v807
        %v809 = vrot.slane %v808, 2
        %v810 = vmax.f32 %v808, %v809
        %v811 = vrot.slane %v810, 1
        %v812 = vmax.f32 %v810, %v811
        %v813 = vsub.f32 %v804, %v812
        %v814 = vmul.f32 %v813, 1.442695
        %v815 = vpow.pop %v814
        %v816 = vld [vmem:[%s11] sm:$0xff]
        %vm817 = vcmask 64512
        %v819 = vsel %vm817, %v816, 0
        %821 = vmatprep.subr.mxu0 0.0
        %822 = vmatpush1.msra.mxu0 0.0
        %823 = vmatprep.subr.mxu0 0.0
        %824 = vmatpush1.msra.mxu0 0.0
        %825 = vmatprep.subr.mxu0 0.0
        %826 = vmatpush1.msra.mxu0 0.0
        %827 = vmatprep.subr.mxu0 0.0
        %828 = vmatpush1.msra.mxu0 0.0
        %829 = vmatprep.subr.mxu0 0.0
        %830 = vmatpush1.msra.mxu0 0.0
        %831 = vmatprep.subr.mxu0 0.0
        %832 = vmatpush1.msra.mxu0 0.0
        %833 = vmatprep.subr.mxu0 0.0
        %834 = vmatpush1.msra.mxu0 0.0
        %835 = vmatprep.subr.mxu0 0.0
        %836 = vmatpush1.msra.mxu0 0.0
        %837 = vmatprep.subr.mxu0 0.0
        %838 = vmatpush1.msra.mxu0 0.0
        %839 = vmatprep.subr.mxu0 0.0
        %840 = vmatpush1.msra.mxu0 0.0
        %841 = vmatprep.subr.mxu0 0.0
        %842 = vmatpush1.msra.mxu0 0.0
        %843 = vmatprep.subr.mxu0 0.0
        %844 = vmatpush1.msra.mxu0 0.0
        %845 = vmatprep.subr.mxu0 0.0
        %846 = vmatpush1.msra.mxu0 0.0
        %847 = vmatprep.subr.mxu0 0.0
        %848 = vmatpush1.msra.mxu0 0.0
        %849 = vmatprep.subr.mxu0 0.0
        %850 = vmatpush1.msra.mxu0 0.0
        %851 = vmatprep.subr.mxu0 0.0
        %852 = vmatpush1.msra.mxu0 %v815
        %853 = vmatprep.subr.mxu0 0.0
        %854 = vmatpush2.msra.mxu0 0.0
        %855 = vmatprep.subr.mxu0 0.0
        %856 = vmatpush2.msra.mxu0 0.0
        %857 = vmatprep.subr.mxu0 0.0
        %858 = vmatpush2.msra.mxu0 0.0
        %859 = vmatprep.subr.mxu0 0.0
        %860 = vmatpush2.msra.mxu0 0.0
        %861 = vmatprep.subr.mxu0 0.0
        %862 = vmatpush2.msra.mxu0 0.0
        %863 = vmatprep.subr.mxu0 0.0
        %864 = vmatpush2.msra.mxu0 0.0
        %865 = vmatprep.subr.mxu0 0.0
        %866 = vmatpush2.msra.mxu0 0.0
        %867 = vmatprep.subr.mxu0 0.0
        %868 = vmatpush2.msra.mxu0 0.0
        %869 = vmatprep.subr.mxu0 0.0
        %870 = vmatpush2.msra.mxu0 0.0
        %871 = vmatprep.subr.mxu0 0.0
        %872 = vmatpush2.msra.mxu0 0.0
        %873 = vmatprep.subr.mxu0 0.0
        %874 = vmatpush2.msra.mxu0 0.0
        %875 = vmatprep.subr.mxu0 0.0
        %876 = vmatpush2.msra.mxu0 0.0
        %877 = vmatprep.subr.mxu0 0.0
        %878 = vmatpush2.msra.mxu0 0.0
        %879 = vmatprep.subr.mxu0 0.0
        %880 = vmatpush2.msra.mxu0 0.0
        %881 = vmatprep.subr.mxu0 0.0
        %882 = vmatpush2.msra.mxu0 0.0
        %883 = vmatprep.subr.mxu0 0.0
        %884 = vmatpush2.msra.mxu0 0.0
        %885 = vmatprep.mubr.f32.mxu0 0.0
        %886 = vmatmul.mubr.f32.gmra.mxu0 %v819
        %v887 = vpop.f32.mrf.mxu0
        %v888 = vadd.f32 0.0, %v887
        %v889 = vpop.f32.mrf.mxu0
        %890 = vdwg.mxu0
        %v891 = vrcp.pop %v888
        %v892 = vmul.f32 %v815, %v891
        %v893 = vld [vmem:[#allocation2] sm:$0xff]
        %894 = vxpose.xlu0.b32.start [1/16] %v893, 128
        %895 = vxpose.xlu0.b32.cont [2/16] 0.0, 128
        %896 = vxpose.xlu0.b32.cont [3/16] 0.0, 128
        %897 = vxpose.xlu0.b32.cont [4/16] 0.0, 128
        %898 = vxpose.xlu0.b32.cont [5/16] 0.0, 128
        %899 = vxpose.xlu0.b32.cont [6/16] 0.0, 128
        %900 = vxpose.xlu0.b32.cont [7/16] 0.0, 128
        %901 = vxpose.xlu0.b32.cont [8/16] 0.0, 128
        %902 = vxpose.xlu0.b32.cont [9/16] 0.0, 128
        %903 = vxpose.xlu0.b32.cont [10/16] 0.0, 128
        %904 = vxpose.xlu0.b32.cont [11/16] 0.0, 128
        %905 = vxpose.xlu0.b32.cont [12/16] 0.0, 128
        %906 = vxpose.xlu0.b32.cont [13/16] 0.0, 128
        %907 = vxpose.xlu0.b32.cont [14/16] 0.0, 128
        %908 = vxpose.xlu0.b32.cont [15/16] 0.0, 128
        %909 = vxpose.xlu0.b32.end [16/16] 0.0, 128
        %v910 = vpop.trf.xlu0
        %v911 = vpop.trf.xlu0
        %v912 = vpop.trf.xlu0
        %v913 = vpop.trf.xlu0
        %v914 = vpop.trf.xlu0
        %v915 = vpop.trf.xlu0
        %v916 = vpop.trf.xlu0
        %v917 = vpop.trf.xlu0
        %v918 = vpop.trf.xlu0
        %v919 = vpop.trf.xlu0
        %v920 = vpop.trf.xlu0
        %v921 = vpop.trf.xlu0
        %v922 = vpop.trf.xlu0
        %v923 = vpop.trf.xlu0
        %v924 = vpop.trf.xlu0
        %v925 = vpop.trf.xlu0
        %v927 = vsel %vm817, %v910, 0
        %929 = vmatprep.subr.mxu0 0.0
        %930 = vmatpush1.msra.mxu0 0.0
        %931 = vmatprep.subr.mxu0 0.0
        %932 = vmatpush1.msra.mxu0 0.0
        %933 = vmatprep.subr.mxu0 0.0
        %934 = vmatpush1.msra.mxu0 0.0
        %935 = vmatprep.subr.mxu0 0.0
        %936 = vmatpush1.msra.mxu0 0.0
        %937 = vmatprep.subr.mxu0 0.0
        %938 = vmatpush1.msra.mxu0 0.0
        %939 = vmatprep.subr.mxu0 0.0
        %940 = vmatpush1.msra.mxu0 0.0
        %941 = vmatprep.subr.mxu0 0.0
        %942 = vmatpush1.msra.mxu0 0.0
        %943 = vmatprep.subr.mxu0 0.0
        %944 = vmatpush1.msra.mxu0 0.0
        %945 = vmatprep.subr.mxu0 0.0
        %946 = vmatpush1.msra.mxu0 0.0
        %947 = vmatprep.subr.mxu0 0.0
        %948 = vmatpush1.msra.mxu0 0.0
        %949 = vmatprep.subr.mxu0 0.0
        %950 = vmatpush1.msra.mxu0 0.0
        %951 = vmatprep.subr.mxu0 0.0
        %952 = vmatpush1.msra.mxu0 0.0
        %953 = vmatprep.subr.mxu0 0.0
        %954 = vmatpush1.msra.mxu0 0.0
        %955 = vmatprep.subr.mxu0 0.0
        %956 = vmatpush1.msra.mxu0 0.0
        %957 = vmatprep.subr.mxu0 0.0
        %958 = vmatpush1.msra.mxu0 0.0
        %959 = vmatprep.subr.mxu0 0.0
        %960 = vmatpush1.msra.mxu0 %v892
        %961 = vmatprep.subr.mxu0 0.0
        %962 = vmatpush2.msra.mxu0 0.0
        %963 = vmatprep.subr.mxu0 0.0
        %964 = vmatpush2.msra.mxu0 0.0
        %965 = vmatprep.subr.mxu0 0.0
        %966 = vmatpush2.msra.mxu0 0.0
        %967 = vmatprep.subr.mxu0 0.0
        %968 = vmatpush2.msra.mxu0 0.0
        %969 = vmatprep.subr.mxu0 0.0
        %970 = vmatpush2.msra.mxu0 0.0
        %971 = vmatprep.subr.mxu0 0.0
        %972 = vmatpush2.msra.mxu0 0.0
        %973 = vmatprep.subr.mxu0 0.0
        %974 = vmatpush2.msra.mxu0 0.0
        %975 = vmatprep.subr.mxu0 0.0
        %976 = vmatpush2.msra.mxu0 0.0
        %977 = vmatprep.subr.mxu0 0.0
        %978 = vmatpush2.msra.mxu0 0.0
        %979 = vmatprep.subr.mxu0 0.0
        %980 = vmatpush2.msra.mxu0 0.0
        %981 = vmatprep.subr.mxu0 0.0
        %982 = vmatpush2.msra.mxu0 0.0
        %983 = vmatprep.subr.mxu0 0.0
        %984 = vmatpush2.msra.mxu0 0.0
        %985 = vmatprep.subr.mxu0 0.0
        %986 = vmatpush2.msra.mxu0 0.0
        %987 = vmatprep.subr.mxu0 0.0
        %988 = vmatpush2.msra.mxu0 0.0
        %989 = vmatprep.subr.mxu0 0.0
        %990 = vmatpush2.msra.mxu0 0.0
        %991 = vmatprep.subr.mxu0 0.0
        %992 = vmatpush2.msra.mxu0 0.0
        %993 = vmatprep.mubr.f32.mxu0 0.0
        %994 = vmatmul.mubr.f32.gmra.mxu0 %v927
        %v995 = vpop.f32.mrf.mxu0
        %v996 = vadd.f32 0.0, %v995
        %v997 = vpop.f32.mrf.mxu0
        %998 = vdwg.mxu0
        %v999 = vld [vmem:[%s8] sm:$0xf]
        %v1000 = vld [vmem:[%s9] sm:$0xf]
        %1002 = vset.pattern.permute.xlu0 0
        %1003 = vperm.xlu0 %1002, %v1000
        %v1004 = vpop.permute.xlu0 %1003
        %v1007 = vsel %vm817, %v999, 0
        %1009 = vmatprep.subr.mxu0 0.0
        %1010 = vmatpush1.msra.mxu0 0.0
        %1011 = vmatprep.subr.mxu0 0.0
        %1012 = vmatpush1.msra.mxu0 0.0
        %1013 = vmatprep.subr.mxu0 0.0
        %1014 = vmatpush1.msra.mxu0 0.0
        %1015 = vmatprep.subr.mxu0 0.0
        %1016 = vmatpush1.msra.mxu0 0.0
        %1017 = vmatprep.subr.mxu0 0.0
        %1018 = vmatpush1.msra.mxu0 0.0
        %1019 = vmatprep.subr.mxu0 0.0
        %1020 = vmatpush1.msra.mxu0 0.0
        %1021 = vmatprep.subr.mxu0 0.0
        %1022 = vmatpush1.msra.mxu0 0.0
        %1023 = vmatprep.subr.mxu0 0.0
        %1024 = vmatpush1.msra.mxu0 0.0
        %1025 = vmatprep.subr.mxu0 0.0
        %1026 = vmatpush1.msra.mxu0 0.0
        %1027 = vmatprep.subr.mxu0 0.0
        %1028 = vmatpush1.msra.mxu0 0.0
        %1029 = vmatprep.subr.mxu0 0.0
        %1030 = vmatpush1.msra.mxu0 0.0
        %1031 = vmatprep.subr.mxu0 0.0
        %1032 = vmatpush1.msra.mxu0 0.0
        %1033 = vmatprep.subr.mxu0 0.0
        %1034 = vmatpush1.msra.mxu0 0.0
        %1035 = vmatprep.subr.mxu0 0.0
        %1036 = vmatpush1.msra.mxu0 0.0
        %1037 = vmatprep.subr.mxu0 0.0
        %1038 = vmatpush1.msra.mxu0 0.0
        %1039 = vmatprep.subr.mxu0 0.0
        %1040 = vmatpush1.msra.mxu0 %v996
        %1041 = vmatprep.subr.mxu0 0.0
        %1042 = vmatpush2.msra.mxu0 0.0
        %1043 = vmatprep.subr.mxu0 0.0
        %1044 = vmatpush2.msra.mxu0 0.0
        %1045 = vmatprep.subr.mxu0 0.0
        %1046 = vmatpush2.msra.mxu0 0.0
        %1047 = vmatprep.subr.mxu0 0.0
        %1048 = vmatpush2.msra.mxu0 0.0
        %1049 = vmatprep.subr.mxu0 0.0
        %1050 = vmatpush2.msra.mxu0 0.0
        %1051 = vmatprep.subr.mxu0 0.0
        %1052 = vmatpush2.msra.mxu0 0.0
        %1053 = vmatprep.subr.mxu0 0.0
        %1054 = vmatpush2.msra.mxu0 0.0
        %1055 = vmatprep.subr.mxu0 0.0
        %1056 = vmatpush2.msra.mxu0 0.0
        %1057 = vmatprep.subr.mxu0 0.0
        %1058 = vmatpush2.msra.mxu0 0.0
        %1059 = vmatprep.subr.mxu0 0.0
        %1060 = vmatpush2.msra.mxu0 0.0
        %1061 = vmatprep.subr.mxu0 0.0
        %1062 = vmatpush2.msra.mxu0 0.0
        %1063 = vmatprep.subr.mxu0 0.0
        %1064 = vmatpush2.msra.mxu0 0.0
        %1065 = vmatprep.subr.mxu0 0.0
        %1066 = vmatpush2.msra.mxu0 0.0
        %1067 = vmatprep.subr.mxu0 0.0
        %1068 = vmatpush2.msra.mxu0 0.0
        %1069 = vmatprep.subr.mxu0 0.0
        %1070 = vmatpush2.msra.mxu0 0.0
        %1071 = vmatprep.subr.mxu0 0.0
        %1072 = vmatpush2.msra.mxu0 0.0
        %1073 = vmatprep.mubr.f32.mxu0 0.0
        %1074 = vmatmul.mubr.f32.gmra.mxu0 %v1007
        %v1075 = vpop.f32.mrf.mxu0
        %v1076 = vadd.f32 %v1004, %v1075
        %v1077 = vpop.f32.mrf.mxu0
        %1078 = vdwg.mxu0
        %v1079 = vadd.f32 %v1076, %v721
        %1080 = vst [vmem:[%s443] sm:$0xf] %v1079
        %s1081 = sand.u32 %s312, 1
        %s1082 = scalar_lea.sflag [#allocation4], %s1081
        %s1083 = sand.u32 %s312, 1
        %s1084 = smul.addr %s1083, 4
        %s1085 = scalar_lea.vmem [#allocation3], %s1084
        // Predicated region
        $region73: #{tpu_custom_call.1} parent=67 // pred_check
          %p1086 = pneg %p322
        $region74: #{tpu_custom_call.1} parent=67 // pred_check_branch
          %1088 = sbr.rel (%p1086) target = $region76
        $region75: #{tpu_custom_call.1} parent=67 // pred_region
          %s1090 = ssub.s32 64, 64
          %1091 = vsyncadd %s1082, %s1090
          %s1092 = smul.addr %s30, 2
          %s1093 = sadd.s32 %s31, %s1092
          %s1094 = smul.addr %s1093, 64
          %s1095 = scalar_lea.hbm %s12, %s1094
          %s1097 = sshll.u32 %s1085, 4
          %s1098 = int_to_ptr.vmem [resolvable:$true] %s1097
          %1100 = dma.vmem_to_hbm [thread:$0]  %s1098, 64, %s1095, %s1082
        $region76: #{tpu_custom_call.1} parent=67 // pred_fallthru
          _
      $region68: #{tpu_custom_call.1} parent=5 // pred_fallthru
        _
      %p1101 = scmp.le.s32.totalorder 2, %s21
      // Predicated region
      $region77: #{tpu_custom_call.1} parent=5 // pred_check
        %p1102 = pneg %p1101
      $region78: #{tpu_custom_call.1} parent=5 // pred_check_branch
        %1104 = sbr.rel (%p1102) target = $region80
      $region79: #{tpu_custom_call.1} parent=5 // pred_region
        %s1105 = ssub.s32 %s21, 2
        // Predicated region
        $region81: #{tpu_custom_call.1} parent=79 // pred_check
          %p1106 = pneg %p328
        $region82: #{tpu_custom_call.1} parent=79 // pred_check_branch
          %1108 = sbr.rel (%p1106) target = $region84
        $region83: #{tpu_custom_call.1} parent=79 // pred_region
          %s1109 = sand.u32 %s313, 1
          %s1110 = scalar_lea.sflag [#allocation4], %s1109
          %s1111 = sand.u32 %s313, 1
          %s1112 = smul.addr %s1111, 4
          %s1113 = scalar_lea.vmem [#allocation3], %s1112
          %1114 = dma.done %s1110, 64
        $region84: #{tpu_custom_call.1} parent=79 // pred_fallthru
          _
      $region80: #{tpu_custom_call.1} parent=5 // pred_fallthru
        _
    $region6: #{tpu_custom_call.1} parent=1 // loop_footer
      %s25 = sadd.s32 1, %s21
    $region7: #{tpu_custom_call.1} parent=1 // loop_footer_branch
      %20 = sbr.rel target = $region3
    $region8: #{tpu_custom_call.1} parent=1 // loop_exit
      _
    %1115 = vsyncpa [#allocation4], 1
    %s1116 = scalar_lea.sflag [#allocation4], 1
    %1117 = vsyncpa %s1116, 1

</llo_original>
